<compile_context>
chip_gen: v7x
topology: tpu7x:2x2x1
jax: 0.10.0
libtpu: 0.0.40
codegen_flags: <defaults>
</compile_context>

<pallas_src>
import functools
import math

import jax
import jax.numpy as jnp
from jax.experimental import pallas as pl
from jax.experimental.pallas import tpu as pltpu

_BLOCK_ELEMS = 1 << 20          # ~1M elems/block -> <=28 MiB double-buffered (stochastic)
_WIDTHS = (2048, 1024, 512, 256, 128)
_AUTO_PALLAS_MIN_ELEMS = 1 << 21


def _round_up(x, m):
    return ((x + m - 1) // m) * m


def _as_mask(x):
    """bool view of an arbitrary-dtype 'used' array without gratuitous converts."""
    return x if x.dtype == jnp.bool_ else (x != 0)


def _decrease_body(supp, mask, out_dtype):
    """where(mask, supp - 1, supp) then clamp(min=0); unsigned-wrap safe."""
    if jnp.issubdtype(supp.dtype, jnp.unsignedinteger):
        work = supp.astype(jnp.int32)          # avoid 0 - 1 wraparound
        new = jnp.maximum(jnp.where(mask, work - 1, work), 0)
    else:
        new = jnp.maximum(jnp.where(mask, supp - 1, supp), 0)
    return new.astype(out_dtype)


def _stochastic_kernel(decrease_probability, supp_ref, used_ref, rand_ref,
                       out_supp_ref, out_mask_ref):
    """Elementwise suppressant decrease on one (block_rows, W) tile (stochastic)."""
    mask = jnp.logical_and(_as_mask(used_ref[...]),
                           rand_ref[...] < decrease_probability)
    out_supp_ref[...] = _decrease_body(supp_ref[...], mask, out_supp_ref.dtype)
    out_mask_ref[...] = mask.astype(out_mask_ref.dtype)


def _deterministic_kernel(supp_ref, used_ref, out_supp_ref, out_mask_ref):
    """Elementwise suppressant decrease (deterministic: mask = used)."""
    mask = _as_mask(used_ref[...])
    out_supp_ref[...] = _decrease_body(supp_ref[...], mask, out_supp_ref.dtype)
    out_mask_ref[...] = mask.astype(out_mask_ref.dtype)


def _fused_path(suppressants, used_suppressants, randomness_source,
                stochastic_decrease, decrease_probability):
    """Single fused XLA elementwise op (small / ragged shapes)."""
    mask = _as_mask(used_suppressants)
    if stochastic_decrease:
        mask = jnp.logical_and(mask, randomness_source < decrease_probability)
    return _decrease_body(suppressants, mask, suppressants.dtype), mask


def suppressant_decrease(suppressants, used_suppressants, randomness_source=None, *,
                         stochastic_decrease, decrease_probability,
                         use_pallas=None, width=None, block_rows=None):
    """Pallas implementation of SuppressantDecreaseTransition.forward.

    Args:
      suppressants:      (B, A) numeric array (state.suppressants, native dtype kept)
      used_suppressants: (B, A) bool/int array
      randomness_source: (B, A) float array, required when stochastic_decrease=True
      width/block_rows:  test-only tiling overrides (block_rows must be a multiple
                         of 32 or equal to the row count).
    Returns:
      (new_suppressants same dtype/shape, decrease_mask bool same shape)
    """
    orig_shape = suppressants.shape
    total = math.prod(orig_shape)

    if stochastic_decrease and randomness_source is None:
        raise ValueError("randomness_source required when stochastic_decrease=True")

    # Lane-dense width: largest W dividing the element count (no padding, ever).
    if width is None:
        width = next((w for w in _WIDTHS if total % w == 0), None)

    if use_pallas is None:
        use_pallas = (width is not None) and (total >= _AUTO_PALLAS_MIN_ELEMS)
    if width is None:
        # Ragged totals: a pad/un-pad pair would double HBM traffic -> fused path.
        use_pallas = False

    if not use_pallas:
        return _fused_path(suppressants, used_suppressants, randomness_source,
                           stochastic_decrease, decrease_probability)

    rows = total // width
    if block_rows is None:
        target = max(32, _BLOCK_ELEMS // width)
        if rows < 64:
            block_rows = rows                              # tiny: one full-extent tile
        elif rows <= 2 * target:
            # Always give the grid >= 2 steps so both v7x TensorCores get work.
            block_rows = _round_up(pl.cdiv(rows, 2), 32)
        else:
            block_rows = target
    grid = (pl.cdiv(rows, block_rows),)                    # ragged last block is masked

    # Pure reshapes (free for contiguous row-major arrays): no casts, no pads.
    supp2d = suppressants.reshape(rows, width)
    used2d = used_suppressants.reshape(rows, width)

    spec = pl.BlockSpec((block_rows, width), lambda i: (i, 0))

    if stochastic_decrease:
        kernel = functools.partial(_stochastic_kernel, float(decrease_probability))
        operands = (supp2d, used2d, randomness_source.reshape(rows, width))
        in_specs = [spec, spec, spec]
    else:
        kernel = _deterministic_kernel                      # randomness never DMA'd
        operands = (supp2d, used2d)
        in_specs = [spec, spec]

    new2d, mask2d = pl.pallas_call(
        kernel,
        out_shape=(
            jax.ShapeDtypeStruct((rows, width), suppressants.dtype),
            jax.ShapeDtypeStruct((rows, width), jnp.bool_),   # bool out, no post-pass
        ),
        grid_spec=pltpu.PrefetchScalarGridSpec(
            num_scalar_prefetch=0,
            grid=grid,
            in_specs=in_specs,
            out_specs=[spec, spec],
        ),
        compiler_params=pltpu.CompilerParams(
            dimension_semantics=("parallel",),          # megacore / v7x 2-TC sharding
            vmem_limit_bytes=48 * 1024 * 1024,          # headroom over 32 MiB default,
        ),                                              # still < v7x 64 MiB physical
    )(*operands)

    return new2d.reshape(orig_shape), mask2d.reshape(orig_shape)


if __name__ == "__main__":
    # agent_shape = (batch, num_agents) — small, lane-aligned demo shape.
    B, A = 8, 128
    decrease_probability = 0.6

    key = jax.random.PRNGKey(0)
    k1, k2, k3 = jax.random.split(key, 3)
    suppressants = jax.random.randint(k1, (B, A), 0, 4).astype(jnp.float32)
    used_suppressants = jax.random.bernoulli(k2, 0.5, (B, A))
    randomness_source = jax.random.uniform(k3, (B, A), dtype=jnp.float32)

    # 1) Stochastic path (3-operand kernel), Pallas path forced at demo size.
    new_supp, dec_mask = suppressant_decrease(
        suppressants, used_suppressants, randomness_source,
        stochastic_decrease=True, decrease_probability=decrease_probability,
        use_pallas=True)
    jax.block_until_ready((new_supp, dec_mask))
    ref_supp, ref_mask = _fused_path(suppressants, used_suppressants,
                                     randomness_source, True, decrease_probability)
    assert new_supp.dtype == suppressants.dtype and dec_mask.dtype == jnp.bool_
    assert jnp.array_equal(new_supp, ref_supp)
    assert jnp.array_equal(dec_mask, ref_mask)

    # 2) Deterministic path (randomness operand never DMA'd).
    new_supp_d, dec_mask_d = suppressant_decrease(
        suppressants, used_suppressants, None,
        stochastic_decrease=False, decrease_probability=decrease_probability,
        use_pallas=True)
    jax.block_until_ready((new_supp_d, dec_mask_d))
    ref_supp_d, ref_mask_d = _fused_path(suppressants, used_suppressants,
                                         None, False, decrease_probability)
    assert jnp.array_equal(new_supp_d, ref_supp_d)
    assert jnp.array_equal(dec_mask_d, ref_mask_d)

    # 3) Multi-step grid with a ragged (masked) last block, small forced tiling.
    B2, A2 = 100, 128
    s2 = jax.random.randint(k1, (B2, A2), 0, 4).astype(jnp.float32)
    u2 = jax.random.bernoulli(k2, 0.5, (B2, A2))
    r2 = jax.random.uniform(k3, (B2, A2), dtype=jnp.float32)
    o2, m2 = suppressant_decrease(
        s2, u2, r2, stochastic_decrease=True,
        decrease_probability=decrease_probability,
        use_pallas=True, width=128, block_rows=32)        # grid=(4,), last block = 4 rows
    jax.block_until_ready((o2, m2))
    ro2, rm2 = _fused_path(s2, u2, r2, True, decrease_probability)
    assert jnp.array_equal(o2, ro2)
    assert jnp.array_equal(m2, rm2)

    # 4) Ragged element count (not a multiple of 128) -> fused fallback, no padding.
    s3 = jax.random.randint(k1, (5, 7), 0, 4).astype(jnp.float32)
    u3 = jax.random.bernoulli(k2, 0.5, (5, 7))
    r3 = jax.random.uniform(k3, (5, 7), dtype=jnp.float32)
    o3, m3 = suppressant_decrease(
        s3, u3, r3, stochastic_decrease=True,
        decrease_probability=decrease_probability, use_pallas=True)
    jax.block_until_ready((o3, m3))

    print("KERNEL_OK")
</pallas_src>

<mosaic_0001>
module attributes {stable_mosaic.version = 11 : i64} {
  func.func @_stochastic_kernel(%arg0: i32, %arg1: memref<1x1024xf32, #tpu.memory_space<vmem>>, %arg2: memref<1x1024xi32, #tpu.memory_space<vmem>>, %arg3: memref<1x1024xf32, #tpu.memory_space<vmem>>, %arg4: memref<1x1024xf32, #tpu.memory_space<vmem>>, %arg5: memref<1x1024xi32, #tpu.memory_space<vmem>>) attributes {dimension_semantics = [#tpu.dimension_semantics<parallel>], iteration_bounds = array<i64: 1>, scalar_prefetch = 0 : i64, scratch_operands = 0 : i64, tpu.core_type = #tpu.core_type<tc>, window_params = [{transform_indices = @transform_0, window_bounds = array<i64: 1, 1024>}, {transform_indices = @transform_1, window_bounds = array<i64: 1, 1024>}, {transform_indices = @transform_2, window_bounds = array<i64: 1, 1024>}, {transform_indices = @transform_3, window_bounds = array<i64: 1, 1024>}, {transform_indices = @transform_4, window_bounds = array<i64: 1, 1024>}]} {
    %c0 = arith.constant 0 : index
    %c0_0 = arith.constant 0 : index
    %0 = vector.load %arg2[%c0, %c0_0] : memref<1x1024xi32, #tpu.memory_space<vmem>>, vector<1x1024xi32>
    %cst = arith.constant dense<0> : vector<1x1024xi32>
    %1 = arith.cmpi ne, %0, %cst : vector<1x1024xi32>
    %c0_1 = arith.constant 0 : index
    %c0_2 = arith.constant 0 : index
    %2 = vector.load %arg3[%c0_1, %c0_2] : memref<1x1024xf32, #tpu.memory_space<vmem>>, vector<1x1024xf32>
    %cst_3 = arith.constant 6.000000e-01 : f32
    %3 = vector.broadcast %cst_3 : f32 to vector<1x1024xf32>
    %4 = arith.cmpf olt, %2, %3 : vector<1x1024xf32>
    %5 = arith.andi %1, %4 : vector<1x1024xi1>
    %c0_4 = arith.constant 0 : index
    %c0_5 = arith.constant 0 : index
    %6 = vector.load %arg1[%c0_4, %c0_5] : memref<1x1024xf32, #tpu.memory_space<vmem>>, vector<1x1024xf32>
    %cst_6 = arith.constant 1.000000e+00 : f32
    %7 = vector.broadcast %cst_6 : f32 to vector<1x1024xf32>
    %8 = arith.subf %6, %7 : vector<1x1024xf32>
    %9 = arith.select %5, %8, %6 : vector<1x1024xi1>, vector<1x1024xf32>
    %cst_7 = arith.constant 0.000000e+00 : f32
    %10 = vector.broadcast %cst_7 : f32 to vector<1x1024xf32>
    %11 = arith.maximumf %9, %10 : vector<1x1024xf32>
    %c0_8 = arith.constant 0 : index
    %c0_9 = arith.constant 0 : index
    %12 = vector.load %arg4[%c0_8, %c0_9] : memref<1x1024xf32, #tpu.memory_space<vmem>>, vector<1x1024xf32>
    tpu.vector_store %arg4[%c0_8, %c0_9], %11 {strides = array<i32>} : memref<1x1024xf32, #tpu.memory_space<vmem>>, vector<1x1024xf32>,
    %c0_10 = arith.constant 0 : index
    %c0_11 = arith.constant 0 : index
    %13 = vector.load %arg5[%c0_10, %c0_11] : memref<1x1024xi32, #tpu.memory_space<vmem>>, vector<1x1024xi32>
    %14 = arith.extui %5 : vector<1x1024xi1> to vector<1x1024xi32>
    %cst_12 = arith.constant dense<0> : vector<1x1024xi32>
    %15 = arith.cmpi ne, %13, %cst_12 : vector<1x1024xi32>
    tpu.vector_store %arg5[%c0_10, %c0_11], %14 {strides = array<i32>} : memref<1x1024xi32, #tpu.memory_space<vmem>>, vector<1x1024xi32>,
    return
  }
  func.func @transform_0(%arg0: i32) -> (i32, i32) {
    %c0_i32 = arith.constant 0 : i32
    %c0_i32_0 = arith.constant 0 : i32
    return %arg0, %c0_i32 : i32, i32
  }
  func.func @transform_1(%arg0: i32) -> (i32, i32) {
    %c0_i32 = arith.constant 0 : i32
    %c0_i32_0 = arith.constant 0 : i32
    return %arg0, %c0_i32 : i32, i32
  }
  func.func @transform_2(%arg0: i32) -> (i32, i32) {
    %c0_i32 = arith.constant 0 : i32
    %c0_i32_0 = arith.constant 0 : i32
    return %arg0, %c0_i32 : i32, i32
  }
  func.func @transform_3(%arg0: i32) -> (i32, i32) {
    %c0_i32 = arith.constant 0 : i32
    %c0_i32_0 = arith.constant 0 : i32
    return %arg0, %c0_i32 : i32, i32
  }
  func.func @transform_4(%arg0: i32) -> (i32, i32) {
    %c0_i32 = arith.constant 0 : i32
    %c0_i32_0 = arith.constant 0 : i32
    return %arg0, %c0_i32 : i32, i32
  }
}

</mosaic_0001>

<llo_original>
// kernel: tpu_custom_call.1
$region0: #{tpu_custom_call.1}
  #allocation0 [shape = 'u32[]', space=smem, size = 0x4, offset = 0x4, fixed_abs, tag = 'smem constant byte address 0x4 - core index']
  #allocation1 [shape = 'u32[144,128]{1,0:T(1,128)}', space=vmem, size = 0x12000, scoped, tag = 'internal scratch']
  %s0 = inlined_call_operand.vmem [shape: f32[1,1024], index: 0, kind: input, shape index: {}]
  %s1 = inlined_call_operand.vmem [shape: s32[1,1024], index: 1, kind: input, shape index: {}]
  %s2 = inlined_call_operand.vmem [shape: f32[1,1024], index: 2, kind: input, shape index: {}]
  %s3 = inlined_call_operand.hbm [shape: f32[1,1024], index: 3, kind: output, shape index: {0}]
  %s4 = inlined_call_operand.vmem [shape: s32[1,1024], index: 4, kind: output, shape index: {1}]
  %5 = xla_tuple %s3, %s4
  %s6 = sld [smem:[#allocation0]]
  $region30: #{tpu_custom_call.1} parent=0
    _
  %s8 = ssub.s32 1, %s6
  %s9 = scalar_select 0, %s8, %s6
  $region1: #{tpu_custom_call.1} parent=0
    #allocation2 [shape = 'u8[4096]{0}', space=vmem, size = 0x1000, scoped, tag = 'output window, operand 0, single buffered']
    #allocation3 [shape = 's32[1]{0}', space=sflag, size = 0x4, scoped, tag = 'scoped memory for tpu_custom_call.1']
    %10 = vsyncpa [#allocation3], 0
    // Predicated region
    $region2: #{tpu_custom_call.1} parent=1 // pred_check
      _
    $region3: #{tpu_custom_call.1} parent=1 // pred_check_branch
      %12 = sbr.rel (0) target = $region5
    $region4: #{tpu_custom_call.1} parent=1 // pred_region
      _
    $region5: #{tpu_custom_call.1} parent=1 // pred_fallthru
      _
    // Predicated region
    $region6: #{tpu_custom_call.1} parent=1 // pred_check
      _
    $region7: #{tpu_custom_call.1} parent=1 // pred_check_branch
      %14 = sbr.rel (0) target = $region9
    $region8: #{tpu_custom_call.1} parent=1 // pred_region
      _
    $region9: #{tpu_custom_call.1} parent=1 // pred_fallthru
      _
    // Predicated region
    $region10: #{tpu_custom_call.1} parent=1 // pred_check
      _
    $region11: #{tpu_custom_call.1} parent=1 // pred_check_branch
      %16 = sbr.rel (0) target = $region13
    $region12: #{tpu_custom_call.1} parent=1 // pred_region
      _
    $region13: #{tpu_custom_call.1} parent=1 // pred_fallthru
      _
    %v17 = vld [vmem:[%s1] sm:$0xff]
    %vm18 = vcmp.ne.s32.totalorder %v17, 0
    %v19 = vld [vmem:[%s2] sm:$0xff]
    %vm20 = vcmp.lt.f32.partialorder %v19, 0.6
    %vm21 = vmand %vm18, %vm20
    %v22 = vld [vmem:[%s0] sm:$0xff]
    %v23 = vsub.f32 %v22, 1.0
    %v24 = vsel %vm21, %v23, %v22
    %v25 = vmax.f32 %v24, 0.0
    %26 = vst [vmem:[#allocation2] sm:$0xff] %v25
    %v27 = vsel %vm21, 1, 0
    %28 = vst [vmem:[%s4] sm:$0xff] %v27
    // Predicated region
    $region14: #{tpu_custom_call.1} parent=1 // pred_check
      _
    $region15: #{tpu_custom_call.1} parent=1 // pred_check_branch
      %30 = sbr.rel (0) target = $region17
    $region16: #{tpu_custom_call.1} parent=1 // pred_region
      %s32 = ssub.s32 128, 128
      %33 = vsyncadd [#allocation3], %s32
      %s35 = sshll.u32 [#allocation2], 4
      %s36 = int_to_ptr.vmem [resolvable:$true] %s35
      %38 = dma.vmem_to_hbm [thread:$0]  %s36, 128, %s3, [#allocation3]
    $region17: #{tpu_custom_call.1} parent=1 // pred_fallthru
      _
    // Predicated region
    $region18: #{tpu_custom_call.1} parent=1 // pred_check
      _
    $region19: #{tpu_custom_call.1} parent=1 // pred_check_branch
      %40 = sbr.rel (0) target = $region21
    $region20: #{tpu_custom_call.1} parent=1 // pred_region
      _
    $region21: #{tpu_custom_call.1} parent=1 // pred_fallthru
      _
    // Predicated region
    $region22: #{tpu_custom_call.1} parent=1 // pred_check
      _
    $region23: #{tpu_custom_call.1} parent=1 // pred_check_branch
      %42 = sbr.rel (0) target = $region25
    $region24: #{tpu_custom_call.1} parent=1 // pred_region
      %43 = dma.done [#allocation3], 128
    $region25: #{tpu_custom_call.1} parent=1 // pred_fallthru
      _
    // Predicated region
    $region26: #{tpu_custom_call.1} parent=1 // pred_check
      _
    $region27: #{tpu_custom_call.1} parent=1 // pred_check_branch
      %45 = sbr.rel (0) target = $region29
    $region28: #{tpu_custom_call.1} parent=1 // pred_region
      _
    $region29: #{tpu_custom_call.1} parent=1 // pred_fallthru
      _
    %46 = vsyncpa [#allocation3], 1

</llo_original>
